<compile_context>
chip_gen: v6e
topology: v6e:2x2x1
jax: 0.10.0
libtpu: 0.0.40
codegen_flags: <defaults>
</compile_context>

<pallas_src>
import math

import jax
import jax.numpy as jnp
from jax import lax
from jax.experimental import pallas as pl
from jax.experimental.pallas import tpu as pltpu


def _pick_tile(dim, cap):
    """Largest tile <= cap that evenly divides dim (falls back to dim)."""
    if dim <= cap:
        return dim
    for t in range(cap, 0, -1):
        if dim % t == 0:
            return t
    return dim


# ---------------------------------------------------------------------------
# Generic tiled linear:  out = x @ w + b   (bf16 MXU inputs, f32 accumulation)
# ---------------------------------------------------------------------------
def _linear_kernel(x_ref, w_ref, b_ref, o_ref):
    acc = jnp.dot(x_ref[...], w_ref[...], preferred_element_type=jnp.float32)
    o_ref[...] = (acc + b_ref[...]).astype(o_ref.dtype)


def _linear(x, w, b, *, out_dtype, tm_cap=256, tn_cap=512):
    M, K = x.shape
    _, N = w.shape
    x = x.astype(jnp.bfloat16)
    w = w.astype(jnp.bfloat16)
    b = b.astype(jnp.float32)
    tm = _pick_tile(M, tm_cap)
    tn = _pick_tile(N, tn_cap)
    return pl.pallas_call(
        _linear_kernel,
        out_shape=jax.ShapeDtypeStruct((M, N), out_dtype),
        grid_spec=pltpu.PrefetchScalarGridSpec(
            num_scalar_prefetch=0,
            grid=(M // tm, N // tn),
            in_specs=[
                pl.BlockSpec((tm, K), lambda i, j: (i, 0)),
                pl.BlockSpec((K, tn), lambda i, j: (0, j)),
                pl.BlockSpec((1, tn), lambda i, j: (0, j)),
            ],
            out_specs=pl.BlockSpec((tm, tn), lambda i, j: (i, j)),
        ),
        compiler_params=pltpu.CompilerParams(
            dimension_semantics=("parallel", "parallel")),
    )(x, w, b)


# ---------------------------------------------------------------------------
# Flash attention over head-major (B, H, T, D) q/k/v (q pre-scaled by 1/sqrt(D))
# ---------------------------------------------------------------------------
def _flash_kernel(q_ref, k_ref, v_ref, o_ref, m_ref, l_ref, acc_ref):
    ki = pl.program_id(3)

    @pl.when(ki == 0)
    def _():
        m_ref[...] = jnp.full_like(m_ref, -jnp.inf)
        l_ref[...] = jnp.zeros_like(l_ref)
        acc_ref[...] = jnp.zeros_like(acc_ref)

    q = q_ref[0, 0]                      # (Tq, D) bf16, pre-scaled
    k = k_ref[0, 0]                      # (Tk, D) bf16
    v = v_ref[0, 0]                      # (Tk, D) bf16

    # Scores: contract last dims directly (no XLU transpose), f32 accumulation.
    s = lax.dot_general(q, k, (((1,), (1,)), ((), ())),
                        preferred_element_type=jnp.float32)      # (Tq, Tk)

    m_prev = m_ref[...]
    m_new = jnp.maximum(m_prev, jnp.max(s, axis=-1, keepdims=True))
    alpha = jnp.exp(m_prev - m_new)
    p = jnp.exp(s - m_new)                                        # f32

    l_ref[...] = alpha * l_ref[...] + jnp.sum(p, axis=-1, keepdims=True)
    acc_ref[...] = alpha * acc_ref[...] + jnp.dot(
        p.astype(v.dtype), v, preferred_element_type=jnp.float32)
    m_ref[...] = m_new

    @pl.when(ki == pl.num_programs(3) - 1)
    def _():
        inv_l = pl.reciprocal(l_ref[...], approx=True)            # EUP slot
        o_ref[0, 0] = (acc_ref[...] * inv_l).astype(o_ref.dtype)


def _flash_attention(q, k, v, *, tq_cap=128, tk_cap=128):
    B, H, T, D = q.shape
    tq = _pick_tile(T, tq_cap)
    tk = _pick_tile(T, tk_cap)
    # Per-step VMEM: a few (tq x tk)/(tq x D) tiles -> a couple of MiB max; fits
    # comfortably even in v7x's 64 MiB VMEM without raising vmem_limit_bytes.
    return pl.pallas_call(
        _flash_kernel,
        out_shape=jax.ShapeDtypeStruct((B, H, T, D), jnp.bfloat16),
        grid_spec=pltpu.PrefetchScalarGridSpec(
            num_scalar_prefetch=0,
            grid=(B, H, T // tq, T // tk),
            in_specs=[
                pl.BlockSpec((1, 1, tq, D), lambda b, h, qi, ki: (b, h, qi, 0)),
                pl.BlockSpec((1, 1, tk, D), lambda b, h, qi, ki: (b, h, ki, 0)),
                pl.BlockSpec((1, 1, tk, D), lambda b, h, qi, ki: (b, h, ki, 0)),
            ],
            out_specs=pl.BlockSpec((1, 1, tq, D),
                                   lambda b, h, qi, ki: (b, h, qi, 0)),
            scratch_shapes=[
                pltpu.VMEM((tq, 1), jnp.float32),   # running max
                pltpu.VMEM((tq, 1), jnp.float32),   # running sum
                pltpu.VMEM((tq, D), jnp.float32),   # output accumulator
            ],
        ),
        compiler_params=pltpu.CompilerParams(
            dimension_semantics=("parallel", "parallel", "parallel", "arbitrary")),
    )(q, k, v)


# ---------------------------------------------------------------------------
# Full SelfAttention forward (weights in (in, out) layout: y = x @ W + b)
# ---------------------------------------------------------------------------
def self_attention(x, wq, bq, wk, bk, wv, bv, wp, bp, *, n_head):
    B, T, C = x.shape
    assert C % n_head == 0
    D = C // n_head
    scale = 1.0 / math.sqrt(D)

    # Fold the 1/sqrt(D) scale into the Q projection; fuse QKV into one matmul.
    w_qkv = jnp.concatenate([wq * scale, wk, wv], axis=1)      # (C, 3C)
    b_qkv = jnp.concatenate([bq * scale, bk, bv], axis=1)      # (1, 3C)

    # 1) Fused QKV projection.
    qkv = _linear(x.reshape(B * T, C), w_qkv, b_qkv, out_dtype=jnp.bfloat16)

    # Wrapper-side layout plumbing: split heads, go head-major (B, H, T, D).
    qkv = qkv.reshape(B, T, 3, n_head, D).transpose(2, 0, 3, 1, 4)
    q, k, v = qkv[0], qkv[1], qkv[2]

    # 2) Flash attention with online softmax.
    y = _flash_attention(q, k, v)                               # (B, H, T, D) bf16

    # Merge heads back to (B*T, C) and 3) single full-K output projection.
    y = y.transpose(0, 2, 1, 3).reshape(B * T, C)
    out = _linear(y, wp, bp, out_dtype=jnp.float32)
    return out.reshape(B, T, C).astype(x.dtype)


# ---------------------------------------------------------------------------
# Pure-JAX reference (f32)
# ---------------------------------------------------------------------------
def reference(x, wq, bq, wk, bk, wv, bv, wp, bp, n_head):
    B, T, C = x.shape
    D = C // n_head
    q = (x @ wq + bq).reshape(B, T, n_head, D).transpose(0, 2, 1, 3)
    k = (x @ wk + bk).reshape(B, T, n_head, D).transpose(0, 2, 1, 3)
    v = (x @ wv + bv).reshape(B, T, n_head, D).transpose(0, 2, 1, 3)
    att = jnp.einsum("bhtd,bhsd->bhts", q, k) / math.sqrt(D)
    att = jax.nn.softmax(att, axis=-1)
    y = jnp.einsum("bhts,bhsd->bhtd", att, v)
    y = y.transpose(0, 2, 1, 3).reshape(B, T, C)
    return y @ wp + bp


if __name__ == "__main__":
    B, T, C, n_head = 2, 8, 32, 4

    key = jax.random.PRNGKey(0)
    keys = jax.random.split(key, 9)
    s = 1.0 / math.sqrt(C)

    x = jax.random.normal(keys[0], (B, T, C), jnp.float32)
    # Weights stored as (in, out) so the kernels compute x @ W + b.
    wq = jax.random.uniform(keys[1], (C, C), jnp.float32, -s, s)
    wk = jax.random.uniform(keys[2], (C, C), jnp.float32, -s, s)
    wv = jax.random.uniform(keys[3], (C, C), jnp.float32, -s, s)
    wp = jax.random.uniform(keys[4], (C, C), jnp.float32, -s, s)
    bq = jax.random.uniform(keys[5], (1, C), jnp.float32, -s, s)
    bk = jax.random.uniform(keys[6], (1, C), jnp.float32, -s, s)
    bv = jax.random.uniform(keys[7], (1, C), jnp.float32, -s, s)
    bp = jax.random.uniform(keys[8], (1, C), jnp.float32, -s, s)

    out = self_attention(x, wq, bq, wk, bk, wv, bv, wp, bp, n_head=n_head)
    out = jax.block_until_ready(out)
    assert out.shape == (B, T, C)

    # Compare against an f32 reference built from bf16-rounded matmul inputs
    # (the kernels feed the MXU bf16 while accumulating / softmaxing in f32).
    def r(a):
        return a.astype(jnp.bfloat16).astype(jnp.float32)

    ref = reference(r(x), r(wq), bq, r(wk), bk, r(wv), bv, r(wp), bp, n_head)
    assert jnp.allclose(out, ref, rtol=2e-2, atol=2e-2), "mismatch vs reference"

    print("KERNEL_OK")
</pallas_src>

<mosaic_0001>
module attributes {stable_mosaic.version = 11 : i64} {
  func.func @_linear_kernel(%arg0: i32, %arg1: i32, %arg2: memref<16x32xbf16, #tpu.memory_space<vmem>>, %arg3: memref<32x96xbf16, #tpu.memory_space<vmem>>, %arg4: memref<1x96xf32, #tpu.memory_space<vmem>>, %arg5: memref<16x96xbf16, #tpu.memory_space<vmem>>) attributes {dimension_semantics = [#tpu.dimension_semantics<parallel>, #tpu.dimension_semantics<parallel>], iteration_bounds = array<i64: 1, 1>, scalar_prefetch = 0 : i64, scratch_operands = 0 : i64, tpu.core_type = #tpu.core_type<tc>, window_params = [{transform_indices = @transform_0, window_bounds = array<i64: 16, 32>}, {transform_indices = @transform_1, window_bounds = array<i64: 32, 96>}, {transform_indices = @transform_2, window_bounds = array<i64: 1, 96>}, {transform_indices = @transform_3, window_bounds = array<i64: 16, 96>}]} {
    %c0 = arith.constant 0 : index
    %c0_0 = arith.constant 0 : index
    %0 = vector.load %arg2[%c0, %c0_0] : memref<16x32xbf16, #tpu.memory_space<vmem>>, vector<16x32xbf16>
    %c0_1 = arith.constant 0 : index
    %c0_2 = arith.constant 0 : index
    %1 = vector.load %arg3[%c0_1, %c0_2] : memref<32x96xbf16, #tpu.memory_space<vmem>>, vector<32x96xbf16>
    %cst = arith.constant dense<0.000000e+00> : vector<16x96xf32>
    %2 = tpu.matmul %0, %1, %cst {dimension_numbers = #tpu.dot_dimension_numbers<[1], [0], [0], [1], [0, 0, 1, 1], [], []>} : vector<16x32xbf16>, vector<32x96xbf16>, vector<16x96xf32> -> vector<16x96xf32>
    %c0_3 = arith.constant 0 : index
    %c0_4 = arith.constant 0 : index
    %3 = vector.load %arg4[%c0_3, %c0_4] : memref<1x96xf32, #tpu.memory_space<vmem>>, vector<1x96xf32>
    %4 = vector.broadcast %3 : vector<1x96xf32> to vector<16x96xf32>
    %5 = arith.addf %2, %4 : vector<16x96xf32>
    %6 = arith.truncf %5 : vector<16x96xf32> to vector<16x96xbf16>
    %c0_5 = arith.constant 0 : index
    %c0_6 = arith.constant 0 : index
    %7 = vector.load %arg5[%c0_5, %c0_6] : memref<16x96xbf16, #tpu.memory_space<vmem>>, vector<16x96xbf16>
    tpu.vector_store %arg5[%c0_5, %c0_6], %6 {strides = array<i32>} : memref<16x96xbf16, #tpu.memory_space<vmem>>, vector<16x96xbf16>,
    return
  }
  func.func @transform_0(%arg0: i32, %arg1: i32) -> (i32, i32) {
    %c0_i32 = arith.constant 0 : i32
    %c0_i32_0 = arith.constant 0 : i32
    return %arg0, %c0_i32 : i32, i32
  }
  func.func @transform_1(%arg0: i32, %arg1: i32) -> (i32, i32) {
    %c0_i32 = arith.constant 0 : i32
    %c0_i32_0 = arith.constant 0 : i32
    return %c0_i32, %arg1 : i32, i32
  }
  func.func @transform_2(%arg0: i32, %arg1: i32) -> (i32, i32) {
    %c0_i32 = arith.constant 0 : i32
    %c0_i32_0 = arith.constant 0 : i32
    return %c0_i32, %arg1 : i32, i32
  }
  func.func @transform_3(%arg0: i32, %arg1: i32) -> (i32, i32) {
    %c0_i32 = arith.constant 0 : i32
    return %arg0, %arg1 : i32, i32
  }
}

</mosaic_0001>

<llo_original>
// kernel: tpu_custom_call.1
$region0: #{tpu_custom_call.1}
  #allocation0 [shape = 'u32[]', space=smem, size = 0x4, offset = 0x4, fixed_abs, tag = 'smem constant byte address 0x4 - core index']
  #allocation1 [shape = 'u32[144,128]{1,0:T(1,128)}', space=vmem, size = 0x12000, scoped, tag = 'internal scratch']
  %s0 = inlined_call_operand.hbm [shape: bf16[16,32], index: 0, kind: input, shape index: {}]
  %s1 = inlined_call_operand.hbm [shape: bf16[32,96], index: 1, kind: input, shape index: {}]
  %s2 = inlined_call_operand.vmem [shape: f32[1,96], index: 2, kind: input, shape index: {}]
  %s3 = inlined_call_operand.hbm [shape: bf16[16,96], index: 3, kind: output, shape index: {}]
  %s4 = sld [smem:[#allocation0]]
  $region30: #{tpu_custom_call.1} parent=0
    _
  %s6 = ssub.s32 1, %s4
  %s7 = scalar_select 0, %s6, %s4
  $region1: #{tpu_custom_call.1} parent=0
    #allocation2 [shape = 'u8[4096]{0}', space=vmem, size = 0x1000, scoped, tag = 'input window, operand 0, single buffered']
    #allocation3 [shape = 's32[1]{0}', space=sflag, size = 0x4, scoped, tag = 'scoped memory for tpu_custom_call.1']
    #allocation4 [shape = 's32[1]{0}', space=sflag, size = 0x4, scoped, tag = 'scoped memory for tpu_custom_call.1']
    #allocation5 [shape = 'u8[8192]{0}', space=vmem, size = 0x2000, scoped, tag = 'input window, operand 1, single buffered']
    #allocation6 [shape = 's32[1]{0}', space=sflag, size = 0x4, scoped, tag = 'scoped memory for tpu_custom_call.1']
    #allocation7 [shape = 'u8[4096]{0}', space=vmem, size = 0x1000, scoped, tag = 'output window, operand 0, single buffered']
    %8 = vsyncpa [#allocation3], 0
    %9 = vsyncpa [#allocation6], 0
    %10 = vsyncpa [#allocation4], 0
    // Predicated region
    $region2: #{tpu_custom_call.1} parent=1 // pred_check
      _
    $region3: #{tpu_custom_call.1} parent=1 // pred_check_branch
      %12 = sbr.rel (0) target = $region5
    $region4: #{tpu_custom_call.1} parent=1 // pred_region
      %s14 = ssub.s32 128, 128
      %15 = vsyncadd [#allocation3], %s14
      %s16 = sshll.u32 [#allocation2], 4
      %s17 = int_to_ptr.vmem [resolvable:$true] %s16
      %22 = dma.hbm_to_vmem [thread:$0]  %s0, 128, %s17, [#allocation3], 64, 64, 4
    $region5: #{tpu_custom_call.1} parent=1 // pred_fallthru
      _
    // Predicated region
    $region6: #{tpu_custom_call.1} parent=1 // pred_check
      _
    $region7: #{tpu_custom_call.1} parent=1 // pred_check_branch
      %24 = sbr.rel (0) target = $region9
    $region8: #{tpu_custom_call.1} parent=1 // pred_region
      %s26 = ssub.s32 256, 256
      %27 = vsyncadd [#allocation6], %s26
      %s28 = sshll.u32 [#allocation5], 4
      %s29 = int_to_ptr.vmem [resolvable:$true] %s28
      %34 = dma.hbm_to_vmem [thread:$0]  %s1, 256, %s29, [#allocation6], 64, 64, 4
    $region9: #{tpu_custom_call.1} parent=1 // pred_fallthru
      _
    // Predicated region
    $region10: #{tpu_custom_call.1} parent=1 // pred_check
      _
    $region11: #{tpu_custom_call.1} parent=1 // pred_check_branch
      %36 = sbr.rel (0) target = $region13
    $region12: #{tpu_custom_call.1} parent=1 // pred_region
      _
    $region13: #{tpu_custom_call.1} parent=1 // pred_fallthru
      _
    // Predicated region
    $region14: #{tpu_custom_call.1} parent=1 // pred_check
      _
    $region15: #{tpu_custom_call.1} parent=1 // pred_check_branch
      %38 = sbr.rel (0) target = $region17
    $region16: #{tpu_custom_call.1} parent=1 // pred_region
      %39 = dma.done [#allocation3], 128
    $region17: #{tpu_custom_call.1} parent=1 // pred_fallthru
      _
    // Predicated region
    $region18: #{tpu_custom_call.1} parent=1 // pred_check
      _
    $region19: #{tpu_custom_call.1} parent=1 // pred_check_branch
      %41 = sbr.rel (0) target = $region21
    $region20: #{tpu_custom_call.1} parent=1 // pred_region
      %42 = dma.done [#allocation6], 256
    $region21: #{tpu_custom_call.1} parent=1 // pred_fallthru
      _
    %v44 = vld [vmem:[#allocation2] sm:$0xf]
    %v45 = vld [vmem:[#allocation2 + $0x4] sm:$0xf]
    %v46 = vld [vmem:[#allocation5] sm:$0xf]
    %v47 = vld [vmem:[#allocation5 + $0x4] sm:$0xf]
    %v48 = vld [vmem:[#allocation5 + $0x8] sm:$0xf]
    %v49 = vld [vmem:[#allocation5 + $0xc] sm:$0xf]
    %v50 = vld [vmem:[%s2] sm:$0x1]
    %v52 = vlaneseq
    %v53 = vshrl.u32 %v52, 7
    %v54 = vsub.s32 0, %v53
    %v55 = vrot.slane %v50, %v54
    %v59 = vunpack.c.l.b16 %v44
    %v60 = vunpack.c.l.b16 %v45
    %v61 = vpack.c.b16 %v60, %v59
    %v66 = vunpack.c.l.b16 %v46
    %v67 = vunpack.c.l.b16 %v47
    %v68 = vunpack.c.l.b16 %v48
    %v69 = vunpack.c.l.b16 %v49
    %v70 = vpack.c.b16 %v67, %v66
    %v71 = vpack.c.b16 %v69, %v68
    %vm74 = vcmask 261120
    %v76 = vsel %vm74, %v61, 0
    %78 = vmatprep.subr.bf16.mxu0 0
    %79 = vmatpush1.bf16.msra.mxu0 0
    %80 = vmatprep.subr.bf16.mxu0 0
    %81 = vmatpush1.bf16.msra.mxu0 0
    %82 = vmatprep.subr.bf16.mxu0 0
    %83 = vmatpush1.bf16.msra.mxu0 0
    %84 = vmatprep.subr.bf16.mxu0 0
    %85 = vmatpush1.bf16.msra.mxu0 0
    %86 = vmatprep.subr.bf16.mxu0 0
    %87 = vmatpush1.bf16.msra.mxu0 0
    %88 = vmatprep.subr.bf16.mxu0 0
    %89 = vmatpush1.bf16.msra.mxu0 0
    %90 = vmatprep.subr.bf16.mxu0 0
    %91 = vmatpush1.bf16.msra.mxu0 %v71
    %92 = vmatprep.subr.bf16.mxu0 0
    %93 = vmatpush1.bf16.msra.mxu0 %v70
    %94 = vmatprep.subr.bf16.mxu0 0
    %95 = vmatpush2.bf16.msra.mxu0 0
    %96 = vmatprep.subr.bf16.mxu0 0
    %97 = vmatpush2.bf16.msra.mxu0 0
    %98 = vmatprep.subr.bf16.mxu0 0
    %99 = vmatpush2.bf16.msra.mxu0 0
    %100 = vmatprep.subr.bf16.mxu0 0
    %101 = vmatpush2.bf16.msra.mxu0 0
    %102 = vmatprep.subr.bf16.mxu0 0
    %103 = vmatpush2.bf16.msra.mxu0 0
    %104 = vmatprep.subr.bf16.mxu0 0
    %105 = vmatpush2.bf16.msra.mxu0 0
    %106 = vmatprep.subr.bf16.mxu0 0
    %107 = vmatpush2.bf16.msra.mxu0 0
    %108 = vmatprep.subr.bf16.mxu0 0
    %109 = vmatpush2.bf16.msra.mxu0 0
    %110 = vmatprep.mubr.bf16.mxu0 0
    %111 = vmatmul.mubr.bf16.gmra.mxu0 %v76
    %v112 = vpop.f32.mrf.mxu0
    %v113 = vadd.f32 %v55, %v112
    %v114 = vpop.f32.mrf.mxu0
    %v115 = vpop.f32.mrf.mxu0
    %v116 = vadd.f32 %v55, %v115
    %v117 = vpop.f32.mrf.mxu0
    %118 = vdwg.mxu0
    %v119 = vpack.c.bf16 %v116, %v113
    %v121 = vunpack.c.l.b16 %v119
    %v122 = vunpack.c.h.b16 %v119
    %v123 = vpack.c.b16 %v121, %v121
    %v124 = vpack.c.b16 %v122, %v122
    %vm127 = vcmask 781312
    %128 = vst.msk [vmem:[#allocation7] sm:$0xf] %vm127, %v123
    %129 = vst.msk [vmem:[#allocation7 + $0x4] sm:$0xf] %vm127, %v124
    // Predicated region
    $region22: #{tpu_custom_call.1} parent=1 // pred_check
      _
    $region23: #{tpu_custom_call.1} parent=1 // pred_check_branch
      %131 = sbr.rel (0) target = $region25
    $region24: #{tpu_custom_call.1} parent=1 // pred_region
      %s133 = ssub.s32 128, 128
      %134 = vsyncadd [#allocation4], %s133
      %s135 = sshll.u32 [#allocation7], 4
      %s136 = int_to_ptr.vmem [resolvable:$true] %s135
      %141 = dma.vmem_to_hbm [thread:$0]  %s136, 128, %s3, [#allocation4], 64, 64, 4
    $region25: #{tpu_custom_call.1} parent=1 // pred_fallthru
      _
    // Predicated region
    $region26: #{tpu_custom_call.1} parent=1 // pred_check
      _
    $region27: #{tpu_custom_call.1} parent=1 // pred_check_branch
      %143 = sbr.rel (0) target = $region29
    $region28: #{tpu_custom_call.1} parent=1 // pred_region
      %144 = dma.done [#allocation4], 128
    $region29: #{tpu_custom_call.1} parent=1 // pred_fallthru
      _
    %145 = vsyncpa [#allocation3], 1
    %146 = vsyncpa [#allocation6], 1
    %147 = vsyncpa [#allocation4], 1

</llo_original>
